<compile_context>
chip_gen: v7x
topology: tpu7x:2x2x1
jax: 0.10.0
libtpu: 0.0.40
codegen_flags: <defaults>
</compile_context>

<pallas_src>
import functools

import jax
import jax.numpy as jnp
import numpy as np
from jax.experimental import pallas as pl
from jax.experimental.pallas import tpu as pltpu


def _round_up(x, m):
    return (x + m - 1) // m * m


def _guess_num_tensorcores():
    """v7x has 2 TensorCores per chip; v5e/v6e have 1.  A wrong guess only affects
    load balancing (never correctness), so fall back to 1 on any surprise."""
    try:
        kind = jax.devices()[0].device_kind.lower()
    except Exception:
        return 1
    return 2 if "v7" in kind else 1


def _choose_tile_n(n_rows, requested, cores):
    """Pick a row-tile size: as large as requested (128-aligned), with the tile count
    rounded to a multiple of the TensorCore count so the parallel grid axis balances."""
    lane = 128
    requested = max(lane, _round_up(requested, lane))
    num_tiles = pl.cdiv(n_rows, requested)
    if cores > 1 and n_rows > cores * lane and num_tiles % cores != 0:
        num_tiles = _round_up(num_tiles, cores)
    if num_tiles <= 1:
        return n_rows                      # single full-extent block (always legal)
    tile = _round_up(pl.cdiv(n_rows, num_tiles), lane)
    return min(tile, _round_up(n_rows, 8))


# ----------------------------------------------------------------------------
# Pallas kernel: entire QMIX mixer hot path for one tile of rows.
# ----------------------------------------------------------------------------
def _qmixer_kernel(q_ref, s_ref, w_ref, b_ref, wv2_ref, bv2_ref, out_ref,
                   *, n_agents, embed_dim):
    A, E = n_agents, embed_dim

    s = s_ref[...]                                       # (TN, D) — already in weight dtype
    q = q_ref[...]                                       # (TN, A) f32

    # One wide hypernet matmul:  [hyper_w_1 | hyper_w_final | hyper_b_1 | V[0]]
    # Weights (D, A*E + 3E) are resident; only the TN LHS rows are pushed.
    h_cat = jnp.dot(s, w_ref[...], preferred_element_type=jnp.float32) + b_ref[...]

    w1 = jnp.abs(h_cat[:, :A * E])                                   # (TN, A*E)
    w_final = jnp.abs(h_cat[:, A * E:A * E + E])                     # (TN, E)
    b1 = h_cat[:, A * E + E:A * E + 2 * E]                           # (TN, E)
    vh = jnp.maximum(h_cat[:, A * E + 2 * E:A * E + 3 * E], 0.0)     # (TN, E)  ReLU of V[0]

    # bmm(agent_qs[:, None, :], w1.view(TN, A, E)) + b1 : A is tiny & static -> unrolled FMAs.
    # TODO(synk): could densify to one (TN, A*E) multiply + XLU roll-adds if VALU proves
    #             co-binding with the MXU in bundle dumps; kept simple/robust for now.
    hidden = b1
    for a in range(A):
        hidden = hidden + q[:, a:a + 1] * w1[:, a * E:(a + 1) * E]

    # ELU (alpha = 1).  exp(min(h,0)) avoids evaluating exp on large positives.
    hidden = jnp.where(hidden > 0, hidden, jnp.exp(jnp.minimum(hidden, 0.0)) - 1.0)

    # y[n] = hidden . w_final  +  (vh . wv2 + bv2), fused as a single lane (XLU) reduction.
    p = hidden * w_final + vh * wv2_ref[...].astype(jnp.float32)     # (TN, E)
    y = jnp.sum(p, axis=-1, keepdims=True) + bv2_ref[...].astype(jnp.float32)  # (TN, 1)

    out_ref[...] = y.astype(out_ref.dtype)


# ----------------------------------------------------------------------------
# Wrapper: tiling and pallas_call plumbing (no input padding, no output slicing).
# ----------------------------------------------------------------------------
def qmixer_forward(agent_qs, states, packed, *, tile_n=1024):
    """QMixer.forward.  agent_qs: (bs, T, n_agents), states: (bs, T, state_dim) -> (bs, T, 1)."""
    bs = agent_qs.shape[0]
    n_agents = agent_qs.shape[-1]
    state_dim = packed["w_cat"].shape[0]
    cat_width = packed["w_cat"].shape[1]
    embed_dim = packed["wv2"].shape[1]
    w_dtype = packed["w_cat"].dtype

    # Free reshapes (no HBM copies); cast states to the weight dtype so bf16 packing
    # halves the dominant DMA stream.  Default packing is f32 -> these casts are no-ops.
    q2 = agent_qs.reshape(-1, n_agents).astype(jnp.float32)
    s2 = states.reshape(-1, state_dim).astype(w_dtype)
    N = q2.shape[0]

    tile_n = _choose_tile_n(N, tile_n, _guess_num_tensorcores())
    num_tiles = pl.cdiv(N, tile_n)

    kernel = functools.partial(_qmixer_kernel, n_agents=n_agents, embed_dim=embed_dim)

    grid_spec = pltpu.PrefetchScalarGridSpec(
        num_scalar_prefetch=0,
        grid=(num_tiles,),
        in_specs=[
            pl.BlockSpec((tile_n, n_agents), lambda i: (i, 0)),      # agent_qs rows
            pl.BlockSpec((tile_n, state_dim), lambda i: (i, 0)),     # state rows
            pl.BlockSpec((state_dim, cat_width), lambda i: (0, 0)),  # fused hypernet W (resident)
            pl.BlockSpec((1, cat_width), lambda i: (0, 0)),          # fused hypernet b
            pl.BlockSpec((1, embed_dim), lambda i: (0, 0)),          # V[2] weight (row)
            pl.BlockSpec((1, 1), lambda i: (0, 0)),                  # V[2] bias
        ],
        out_specs=pl.BlockSpec((tile_n, 1), lambda i: (i, 0)),
    )

    itemsize = jnp.dtype(w_dtype).itemsize
    cost = pl.CostEstimate(
        flops=int(2 * N * state_dim * cat_width + N * (2 * n_agents + 8) * embed_dim),
        transcendentals=int(N * embed_dim),
        bytes_accessed=int(N * state_dim * itemsize + N * n_agents * 4 + N * 4
                           + state_dim * cat_width * itemsize + cat_width * 4
                           + embed_dim * 4 + 4),
    )

    out = pl.pallas_call(
        kernel,
        out_shape=jax.ShapeDtypeStruct((N, 1), jnp.float32),
        grid_spec=grid_spec,
        compiler_params=pltpu.CompilerParams(dimension_semantics=("parallel",)),
        cost_estimate=cost,
    )(q2, s2, packed["w_cat"], packed["b_cat"], packed["wv2"], packed["bv2"])

    return out.reshape(bs, -1, 1)


# ----------------------------------------------------------------------------
# Parameter construction (nn.Linear-style uniform init) + packing for the kernel.
# ----------------------------------------------------------------------------
def _init_linear(key, in_dim, out_dim):
    kw, kb = jax.random.split(key)
    bound = 1.0 / np.sqrt(in_dim)
    w = jax.random.uniform(kw, (in_dim, out_dim), jnp.float32, -bound, bound)  # (in, out)
    b = jax.random.uniform(kb, (1, out_dim), jnp.float32, -bound, bound)
    return w, b


def init_qmixer_params(key, state_dim, n_agents, embed_dim):
    ks = jax.random.split(key, 5)
    ww1, bw1 = _init_linear(ks[0], state_dim, embed_dim * n_agents)   # hyper_w_1
    wwf, bwf = _init_linear(ks[1], state_dim, embed_dim)              # hyper_w_final
    wb1, bb1 = _init_linear(ks[2], state_dim, embed_dim)              # hyper_b_1
    wv1, bv1 = _init_linear(ks[3], state_dim, embed_dim)              # V[0]
    wv2, bv2 = _init_linear(ks[4], embed_dim, 1)                      # V[2]
    return dict(ww1=ww1, bw1=bw1, wwf=wwf, bwf=bwf, wb1=wb1, bb1=bb1,
                wv1=wv1, bv1=bv1, wv2=wv2, bv2=bv2)


def pack_qmixer_params(p, *, dtype=jnp.float32):
    """Pack the four state_dim -> * hypernet Linears into one matmul.

    Column order: [hyper_w_1 (A*E, lane-aligned) | hyper_w_final (E) | hyper_b_1 (E) | V[0] (E)].
    Use dtype=jnp.bfloat16 on v6e/v7x to halve weight + state DMA (retune tolerances);
    accumulation always stays f32."""
    w_cat = jnp.concatenate([p["ww1"], p["wwf"], p["wb1"], p["wv1"]], axis=1).astype(dtype)
    b_cat = jnp.concatenate([p["bw1"], p["bwf"], p["bb1"], p["bv1"]], axis=1).astype(jnp.float32)
    wv2 = p["wv2"].reshape(1, -1).astype(jnp.float32)   # (1, E): applied as a VPU row-scale
    bv2 = p["bv2"].reshape(1, 1).astype(jnp.float32)
    return dict(w_cat=w_cat, b_cat=b_cat, wv2=wv2, bv2=bv2)


# ----------------------------------------------------------------------------
# Pure-JAX reference (mirrors the PyTorch math exactly) for correctness checking.
# ----------------------------------------------------------------------------
def _qmixer_ref(agent_qs, states, p):
    bs = agent_qs.shape[0]
    n_agents = agent_qs.shape[-1]
    E = p["wb1"].shape[1]
    s = states.reshape(-1, states.shape[-1])
    q = agent_qs.reshape(-1, 1, n_agents)
    w1 = jnp.abs(s @ p["ww1"] + p["bw1"]).reshape(-1, n_agents, E)
    b1 = (s @ p["wb1"] + p["bb1"]).reshape(-1, 1, E)
    hidden = jax.nn.elu(jnp.einsum("nqa,nae->nqe", q, w1) + b1)
    wf = jnp.abs(s @ p["wwf"] + p["bwf"]).reshape(-1, E, 1)
    v = (jnp.maximum(s @ p["wv1"] + p["bv1"], 0.0) @ p["wv2"] + p["bv2"]).reshape(-1, 1, 1)
    y = jnp.einsum("nqe,neo->nqo", hidden, wf) + v
    return y.reshape(bs, -1, 1)


# TODO(synk): hypernet_layers == 2 (nn.Sequential hypernets with a hidden ReLU layer) is not
#             implemented; only the default hypernet_layers == 1 path is translated.

if __name__ == "__main__":
    # Small, deterministic example consistent with the module.
    n_agents = 4
    state_shape = (4, 8)                 # prod -> state_dim = 32
    mixing_embed_dim = 32
    bs, T = 2, 8

    state_dim = int(np.prod(state_shape))

    key = jax.random.PRNGKey(0)
    k_q, k_s, k_p = jax.random.split(key, 3)
    agent_qs = jax.random.normal(k_q, (bs, T, n_agents), jnp.float32)
    states = jax.random.normal(k_s, (bs, T, state_dim), jnp.float32)

    params = init_qmixer_params(k_p, state_dim, n_agents, mixing_embed_dim)
    packed = pack_qmixer_params(params)   # pass dtype=jnp.bfloat16 on v6e/v7x for bf16 streams

    fwd = jax.jit(functools.partial(qmixer_forward, tile_n=1024))
    q_tot = fwd(agent_qs, states, packed)
    jax.block_until_ready(q_tot)

    ref = _qmixer_ref(agent_qs, states, params)
    assert q_tot.shape == (bs, T, 1)
    np.testing.assert_allclose(np.asarray(q_tot), np.asarray(ref), rtol=1e-4, atol=1e-4)

    print("KERNEL_OK")
</pallas_src>

<mosaic_0001>
module attributes {stable_mosaic.version = 11 : i64} {
  func.func @_qmixer_kernel(%arg0: i32, %arg1: memref<16x4xf32, #tpu.memory_space<vmem>>, %arg2: memref<16x32xf32, #tpu.memory_space<vmem>>, %arg3: memref<32x224xf32, #tpu.memory_space<vmem>>, %arg4: memref<1x224xf32, #tpu.memory_space<vmem>>, %arg5: memref<1x32xf32, #tpu.memory_space<vmem>>, %arg6: memref<1x1xf32, #tpu.memory_space<vmem>>, %arg7: memref<16x1xf32, #tpu.memory_space<vmem>>) attributes {dimension_semantics = [#tpu.dimension_semantics<parallel>], iteration_bounds = array<i64: 1>, scalar_prefetch = 0 : i64, scratch_operands = 0 : i64, tpu.core_type = #tpu.core_type<tc>, window_params = [{transform_indices = @transform_0, window_bounds = array<i64: 16, 4>}, {transform_indices = @transform_1, window_bounds = array<i64: 16, 32>}, {pipeline_mode = #tpu.pipeline_mode<synchronous>, transform_indices = @transform_2, window_bounds = array<i64: 32, 224>}, {pipeline_mode = #tpu.pipeline_mode<synchronous>, transform_indices = @transform_3, window_bounds = array<i64: 1, 224>}, {pipeline_mode = #tpu.pipeline_mode<synchronous>, transform_indices = @transform_4, window_bounds = array<i64: 1, 32>}, {pipeline_mode = #tpu.pipeline_mode<synchronous>, transform_indices = @transform_5, window_bounds = array<i64: 1, 1>}, {transform_indices = @transform_6, window_bounds = array<i64: 16, 1>}]} {
    %c0 = arith.constant 0 : index
    %c0_0 = arith.constant 0 : index
    %0 = vector.load %arg2[%c0, %c0_0] : memref<16x32xf32, #tpu.memory_space<vmem>>, vector<16x32xf32>
    %c0_1 = arith.constant 0 : index
    %c0_2 = arith.constant 0 : index
    %1 = vector.load %arg1[%c0_1, %c0_2] : memref<16x4xf32, #tpu.memory_space<vmem>>, vector<16x4xf32>
    %c0_3 = arith.constant 0 : index
    %c0_4 = arith.constant 0 : index
    %2 = vector.load %arg3[%c0_3, %c0_4] : memref<32x224xf32, #tpu.memory_space<vmem>>, vector<32x224xf32>
    %cst = arith.constant dense<0.000000e+00> : vector<16x224xf32>
    %3 = tpu.matmul %0, %2, %cst {dimension_numbers = #tpu.dot_dimension_numbers<[1], [0], [0], [1], [0, 0, 1, 1], [], []>} : vector<16x32xf32>, vector<32x224xf32>, vector<16x224xf32> -> vector<16x224xf32>
    %c0_5 = arith.constant 0 : index
    %c0_6 = arith.constant 0 : index
    %4 = vector.load %arg4[%c0_5, %c0_6] : memref<1x224xf32, #tpu.memory_space<vmem>>, vector<1x224xf32>
    %5 = vector.broadcast %4 : vector<1x224xf32> to vector<16x224xf32>
    %6 = arith.addf %3, %5 : vector<16x224xf32>
    %7 = vector.extract_strided_slice %6 {offsets = [0, 0], sizes = [16, 128], strides = [1, 1]} : vector<16x224xf32> to vector<16x128xf32>
    %8 = math.absf %7 : vector<16x128xf32>
    %9 = vector.extract_strided_slice %6 {offsets = [0, 128], sizes = [16, 32], strides = [1, 1]} : vector<16x224xf32> to vector<16x32xf32>
    %10 = math.absf %9 : vector<16x32xf32>
    %11 = vector.extract_strided_slice %6 {offsets = [0, 160], sizes = [16, 32], strides = [1, 1]} : vector<16x224xf32> to vector<16x32xf32>
    %12 = vector.extract_strided_slice %6 {offsets = [0, 192], sizes = [16, 32], strides = [1, 1]} : vector<16x224xf32> to vector<16x32xf32>
    %cst_7 = arith.constant 0.000000e+00 : f32
    %13 = vector.broadcast %cst_7 : f32 to vector<16x32xf32>
    %14 = arith.maximumf %12, %13 : vector<16x32xf32>
    %15 = vector.extract_strided_slice %1 {offsets = [0, 0], sizes = [16, 1], strides = [1, 1]} : vector<16x4xf32> to vector<16x1xf32>
    %16 = vector.extract_strided_slice %8 {offsets = [0, 0], sizes = [16, 32], strides = [1, 1]} : vector<16x128xf32> to vector<16x32xf32>
    %17 = vector.broadcast %15 : vector<16x1xf32> to vector<16x32xf32>
    %18 = arith.mulf %17, %16 : vector<16x32xf32>
    %19 = arith.addf %11, %18 : vector<16x32xf32>
    %20 = vector.extract_strided_slice %1 {offsets = [0, 1], sizes = [16, 1], strides = [1, 1]} : vector<16x4xf32> to vector<16x1xf32>
    %21 = vector.extract_strided_slice %8 {offsets = [0, 32], sizes = [16, 32], strides = [1, 1]} : vector<16x128xf32> to vector<16x32xf32>
    %22 = vector.broadcast %20 : vector<16x1xf32> to vector<16x32xf32>
    %23 = arith.mulf %22, %21 : vector<16x32xf32>
    %24 = arith.addf %19, %23 : vector<16x32xf32>
    %25 = vector.extract_strided_slice %1 {offsets = [0, 2], sizes = [16, 1], strides = [1, 1]} : vector<16x4xf32> to vector<16x1xf32>
    %26 = vector.extract_strided_slice %8 {offsets = [0, 64], sizes = [16, 32], strides = [1, 1]} : vector<16x128xf32> to vector<16x32xf32>
    %27 = vector.broadcast %25 : vector<16x1xf32> to vector<16x32xf32>
    %28 = arith.mulf %27, %26 : vector<16x32xf32>
    %29 = arith.addf %24, %28 : vector<16x32xf32>
    %30 = vector.extract_strided_slice %1 {offsets = [0, 3], sizes = [16, 1], strides = [1, 1]} : vector<16x4xf32> to vector<16x1xf32>
    %31 = vector.extract_strided_slice %8 {offsets = [0, 96], sizes = [16, 32], strides = [1, 1]} : vector<16x128xf32> to vector<16x32xf32>
    %32 = vector.broadcast %30 : vector<16x1xf32> to vector<16x32xf32>
    %33 = arith.mulf %32, %31 : vector<16x32xf32>
    %34 = arith.addf %29, %33 : vector<16x32xf32>
    %cst_8 = arith.constant 0.000000e+00 : f32
    %35 = vector.broadcast %cst_8 : f32 to vector<16x32xf32>
    %36 = arith.cmpf ogt, %34, %35 : vector<16x32xf32>
    %cst_9 = arith.constant 0.000000e+00 : f32
    %37 = vector.broadcast %cst_9 : f32 to vector<16x32xf32>
    %38 = arith.minimumf %34, %37 : vector<16x32xf32>
    %39 = math.exp %38 : vector<16x32xf32>
    %cst_10 = arith.constant 1.000000e+00 : f32
    %40 = vector.broadcast %cst_10 : f32 to vector<16x32xf32>
    %41 = arith.subf %39, %40 : vector<16x32xf32>
    %42 = arith.select %36, %34, %41 : vector<16x32xi1>, vector<16x32xf32>
    %43 = arith.mulf %42, %10 : vector<16x32xf32>
    %c0_11 = arith.constant 0 : index
    %c0_12 = arith.constant 0 : index
    %44 = vector.load %arg5[%c0_11, %c0_12] : memref<1x32xf32, #tpu.memory_space<vmem>>, vector<1x32xf32>
    %45 = vector.broadcast %44 : vector<1x32xf32> to vector<16x32xf32>
    %46 = arith.mulf %14, %45 : vector<16x32xf32>
    %47 = arith.addf %43, %46 : vector<16x32xf32>
    %cst_13 = arith.constant dense<0.000000e+00> : vector<16xf32>
    %48 = vector.multi_reduction <add>, %47, %cst_13 [1] : vector<16x32xf32> to vector<16xf32>
    %49 = vector.shape_cast %48 : vector<16xf32> to vector<16x1xf32>
    %c0_14 = arith.constant 0 : index
    %c0_15 = arith.constant 0 : index
    %50 = vector.load %arg6[%c0_14, %c0_15] : memref<1x1xf32, #tpu.memory_space<vmem>>, vector<1x1xf32>
    %51 = vector.broadcast %50 : vector<1x1xf32> to vector<16x1xf32>
    %52 = arith.addf %49, %51 : vector<16x1xf32>
    %c0_16 = arith.constant 0 : index
    %c0_17 = arith.constant 0 : index
    %53 = vector.load %arg7[%c0_16, %c0_17] : memref<16x1xf32, #tpu.memory_space<vmem>>, vector<16x1xf32>
    tpu.vector_store %arg7[%c0_16, %c0_17], %52 {strides = array<i32>} : memref<16x1xf32, #tpu.memory_space<vmem>>, vector<16x1xf32>,
    return
  }
  func.func @transform_0(%arg0: i32) -> (i32, i32) {
    %c0_i32 = arith.constant 0 : i32
    %c0_i32_0 = arith.constant 0 : i32
    return %arg0, %c0_i32 : i32, i32
  }
  func.func @transform_1(%arg0: i32) -> (i32, i32) {
    %c0_i32 = arith.constant 0 : i32
    %c0_i32_0 = arith.constant 0 : i32
    return %arg0, %c0_i32 : i32, i32
  }
  func.func @transform_2(%arg0: i32) -> (i32, i32) {
    %c0_i32 = arith.constant 0 : i32
    %c0_i32_0 = arith.constant 0 : i32
    %c0_i32_1 = arith.constant 0 : i32
    return %c0_i32, %c0_i32_0 : i32, i32
  }
  func.func @transform_3(%arg0: i32) -> (i32, i32) {
    %c0_i32 = arith.constant 0 : i32
    %c0_i32_0 = arith.constant 0 : i32
    %c0_i32_1 = arith.constant 0 : i32
    return %c0_i32, %c0_i32_0 : i32, i32
  }
  func.func @transform_4(%arg0: i32) -> (i32, i32) {
    %c0_i32 = arith.constant 0 : i32
    %c0_i32_0 = arith.constant 0 : i32
    %c0_i32_1 = arith.constant 0 : i32
    return %c0_i32, %c0_i32_0 : i32, i32
  }
  func.func @transform_5(%arg0: i32) -> (i32, i32) {
    %c0_i32 = arith.constant 0 : i32
    %c0_i32_0 = arith.constant 0 : i32
    %c0_i32_1 = arith.constant 0 : i32
    return %c0_i32, %c0_i32_0 : i32, i32
  }
  func.func @transform_6(%arg0: i32) -> (i32, i32) {
    %c0_i32 = arith.constant 0 : i32
    %c0_i32_0 = arith.constant 0 : i32
    return %arg0, %c0_i32 : i32, i32
  }
}

</mosaic_0001>

<llo_original>
// kernel: qmixer_forward.1
$region0: #{qmixer_forward.1}
  #allocation0 [shape = 'u32[]', space=smem, size = 0x4, offset = 0x4, fixed_abs, tag = 'smem constant byte address 0x4 - core index']
  #allocation1 [shape = 'u32[144,128]{1,0:T(1,128)}', space=vmem, size = 0x12000, scoped, tag = 'internal scratch']
  #allocation2 [shape = 'f32[1,1]{1,0:T(1,128)S(1)}', space=vmem, size = 0x200, scoped, tag = 'scoped memory for qmixer_forward.1']
  %s0 = inlined_call_operand.vmem [shape: f32[16,4], index: 0, kind: input, shape index: {}]
  %s1 = inlined_call_operand.vmem [shape: f32[16,32], index: 1, kind: input, shape index: {}]
  %s2 = inlined_call_operand.hbm [shape: f32[32,224], index: 2, kind: input, shape index: {}]
  %s3 = inlined_call_operand.vmem [shape: f32[1,224], index: 3, kind: input, shape index: {}]
  %s4 = inlined_call_operand.vmem [shape: f32[1,32], index: 4, kind: input, shape index: {}]
  %s5 = inlined_call_operand.<no memory space> [shape: f32[1,1], index: 5, kind: input, shape index: {}]
  %s6 = inlined_call_operand.vmem [shape: f32[16,1], index: 6, kind: output, shape index: {}]
  %s7 = sld [smem:[#allocation0]]
  $region38: #{qmixer_forward.1} parent=0
    _
  %s9 = ssub.s32 1, %s7
  %s10 = scalar_select 0, %s9, %s7
  %v11 = vstv %s5
  %12 = vst [vmem:[#allocation2] sm:$0x1] %v11
  $region1: #{qmixer_forward.1} parent=0
    #allocation3 [shape = 'u8[32768]{0}', space=vmem, size = 0x8000, scoped, tag = 'input window, operand 2, single buffered']
    #allocation4 [shape = 's32[1]{0}', space=sflag, size = 0x4, scoped, tag = 'scoped memory for qmixer_forward.1']
    %13 = vsyncpa [#allocation4], 0
    // Predicated region
    $region2: #{qmixer_forward.1} parent=1 // pred_check
      _
    $region3: #{qmixer_forward.1} parent=1 // pred_check_branch
      %15 = sbr.rel (0) target = $region5
    $region4: #{qmixer_forward.1} parent=1 // pred_region
      _
    $region5: #{qmixer_forward.1} parent=1 // pred_fallthru
      _
    // Predicated region
    $region6: #{qmixer_forward.1} parent=1 // pred_check
      _
    $region7: #{qmixer_forward.1} parent=1 // pred_check_branch
      %17 = sbr.rel (0) target = $region9
    $region8: #{qmixer_forward.1} parent=1 // pred_region
      _
    $region9: #{qmixer_forward.1} parent=1 // pred_fallthru
      _
    // Predicated region
    $region10: #{qmixer_forward.1} parent=1 // pred_check
      _
    $region11: #{qmixer_forward.1} parent=1 // pred_check_branch
      %19 = sbr.rel (0) target = $region13
    $region12: #{qmixer_forward.1} parent=1 // pred_region
      %s21 = ssub.s32 1024, 1024
      %22 = vsyncadd [#allocation4], %s21
      %s23 = sshll.u32 [#allocation3], 4
      %s24 = int_to_ptr.vmem [resolvable:$true] %s23
      %29 = dma.hbm_to_vmem [thread:$0]  %s2, 1024, %s24, [#allocation4], 256, 256, 16
    $region13: #{qmixer_forward.1} parent=1 // pred_fallthru
      _
    // Predicated region
    $region14: #{qmixer_forward.1} parent=1 // pred_check
      _
    $region15: #{qmixer_forward.1} parent=1 // pred_check_branch
      %31 = sbr.rel (0) target = $region17
    $region16: #{qmixer_forward.1} parent=1 // pred_region
      _
    $region17: #{qmixer_forward.1} parent=1 // pred_fallthru
      _
    // Predicated region
    $region18: #{qmixer_forward.1} parent=1 // pred_check
      _
    $region19: #{qmixer_forward.1} parent=1 // pred_check_branch
      %33 = sbr.rel (0) target = $region21
    $region20: #{qmixer_forward.1} parent=1 // pred_region
      _
    $region21: #{qmixer_forward.1} parent=1 // pred_fallthru
      _
    // Predicated region
    $region22: #{qmixer_forward.1} parent=1 // pred_check
      _
    $region23: #{qmixer_forward.1} parent=1 // pred_check_branch
      %35 = sbr.rel (0) target = $region25
    $region24: #{qmixer_forward.1} parent=1 // pred_region
      _
    $region25: #{qmixer_forward.1} parent=1 // pred_fallthru
      _
    // Predicated region
    $region26: #{qmixer_forward.1} parent=1 // pred_check
      _
    $region27: #{qmixer_forward.1} parent=1 // pred_check_branch
      %37 = sbr.rel (0) target = $region29
    $region28: #{qmixer_forward.1} parent=1 // pred_region
      %38 = dma.done [#allocation4], 1024
    $region29: #{qmixer_forward.1} parent=1 // pred_fallthru
      _
    %v39 = vld [vmem:[%s1] sm:$0xff]
    %v40 = vld [vmem:[%s1 + $0x8] sm:$0xff]
    %v41 = vld [vmem:[%s0] sm:$0xff]
    %v42 = vld [vmem:[%s0 + $0x8] sm:$0xff]
    %v43 = vld [vmem:[#allocation3] sm:$0xff]
    %v44 = vld [vmem:[#allocation3 + $0x8] sm:$0xff]
    %v45 = vld [vmem:[#allocation3 + $0x10] sm:$0xff]
    %v46 = vld [vmem:[#allocation3 + $0x18] sm:$0xff]
    %v47 = vld [vmem:[#allocation3 + $0x20] sm:$0xff]
    %v48 = vld [vmem:[#allocation3 + $0x28] sm:$0xff]
    %v49 = vld [vmem:[#allocation3 + $0x30] sm:$0xff]
    %v50 = vld [vmem:[#allocation3 + $0x38] sm:$0xff]
    %v51 = vld [vmem:[%s3] sm:$0x3]
    %v53 = vlaneseq
    %v54 = vshrl.u32 %v53, 7
    %v55 = vsub.s32 0, %v54
    %v56 = vrot.slane %v51, %v55
    %v57 = vlaneseq
    %v58 = vshrl.u32 %v57, 7
    %v59 = vsub.s32 1, %v58
    %v60 = vrot.slane %v51, %v59
    %vm63 = vcmask 261120
    %v65 = vsel %vm63, %v39, 0
    %v68 = vsel %vm63, %v40, 0
    %70 = vmatprep.subr.mxu0 %v44
    %71 = vmatpush1.msra.mxu0 %v43
    %72 = vmatprep.subr.mxu0 %v46
    %73 = vmatpush1.msra.mxu0 %v45
    %74 = vmatprep.subr.mxu0 %v48
    %75 = vmatpush1.msra.mxu0 %v47
    %76 = vmatprep.subr.mxu0 %v50
    %77 = vmatpush1.msra.mxu0 %v49
    %78 = vmatprep.subr.mxu0 0.0
    %79 = vmatpush1.msra.mxu0 0.0
    %80 = vmatprep.subr.mxu0 0.0
    %81 = vmatpush1.msra.mxu0 0.0
    %82 = vmatprep.subr.mxu0 0.0
    %83 = vmatpush1.msra.mxu0 0.0
    %84 = vmatprep.subr.mxu0 0.0
    %85 = vmatpush1.msra.mxu0 0.0
    %86 = vmatprep.subr.mxu0 0.0
    %87 = vmatpush1.msra.mxu0 0.0
    %88 = vmatprep.subr.mxu0 0.0
    %89 = vmatpush1.msra.mxu0 0.0
    %90 = vmatprep.subr.mxu0 0.0
    %91 = vmatpush1.msra.mxu0 0.0
    %92 = vmatprep.subr.mxu0 0.0
    %93 = vmatpush1.msra.mxu0 0.0
    %94 = vmatprep.subr.mxu0 0.0
    %95 = vmatpush1.msra.mxu0 0.0
    %96 = vmatprep.subr.mxu0 0.0
    %97 = vmatpush1.msra.mxu0 0.0
    %98 = vmatprep.subr.mxu0 0.0
    %99 = vmatpush1.msra.mxu0 0.0
    %100 = vmatprep.subr.mxu0 0.0
    %101 = vmatpush1.msra.mxu0 0.0
    %102 = vmatprep.subr.mxu0 0.0
    %103 = vmatpush1.msra.mxu0 0.0
    %104 = vmatprep.subr.mxu0 0.0
    %105 = vmatpush1.msra.mxu0 0.0
    %106 = vmatprep.subr.mxu0 0.0
    %107 = vmatpush1.msra.mxu0 0.0
    %108 = vmatprep.subr.mxu0 0.0
    %109 = vmatpush1.msra.mxu0 0.0
    %110 = vmatprep.subr.mxu0 0.0
    %111 = vmatpush1.msra.mxu0 0.0
    %112 = vmatprep.subr.mxu0 0.0
    %113 = vmatpush1.msra.mxu0 0.0
    %114 = vmatprep.subr.mxu0 0.0
    %115 = vmatpush1.msra.mxu0 0.0
    %116 = vmatprep.subr.mxu0 0.0
    %117 = vmatpush1.msra.mxu0 0.0
    %118 = vmatprep.subr.mxu0 0.0
    %119 = vmatpush1.msra.mxu0 0.0
    %120 = vmatprep.subr.mxu0 0.0
    %121 = vmatpush1.msra.mxu0 0.0
    %122 = vmatprep.subr.mxu0 0.0
    %123 = vmatpush1.msra.mxu0 0.0
    %124 = vmatprep.subr.mxu0 0.0
    %125 = vmatpush1.msra.mxu0 0.0
    %126 = vmatprep.subr.mxu0 0.0
    %127 = vmatpush1.msra.mxu0 0.0
    %128 = vmatprep.subr.mxu0 0.0
    %129 = vmatpush1.msra.mxu0 0.0
    %130 = vmatprep.subr.mxu0 0.0
    %131 = vmatpush1.msra.mxu0 0.0
    %132 = vmatprep.subr.mxu0 0.0
    %133 = vmatpush1.msra.mxu0 0.0
    %134 = vmatprep.mubr.f32.mxu0 0.0
    %135 = vmatmul.mubr.f32.gmra.mrb[0].mxu0 %v65
    %v136 = vpop.f32.mrb[0].mxu0
    %v137 = vadd.f32 %v56, %v136
    %v138 = vpop.f32.mrb[0].mxu0
    %v139 = vadd.f32 %v60, %v138
    %140 = vmatprep.mubr.f32.mxu0 0.0
    %141 = vmatmul.mubr.f32.gmra.mrb[0].mxu0 %v68
    %v142 = vpop.f32.mrb[0].mxu0
    %v143 = vadd.f32 %v56, %v142
    %v144 = vpop.f32.mrb[0].mxu0
    %v145 = vadd.f32 %v60, %v144
    %146 = vdwg.mxu0
    %v147 = vand.u32 2147483647, %v137
    %v148 = vand.u32 2147483647, %v143
    %v149 = vand.u32 2147483647, %v139
    %v150 = vand.u32 2147483647, %v145
    %v151 = vmax.f32 %v139, 0.0
    %v152 = vmax.f32 %v145, 0.0
    %154 = vset.pattern.permute.xlu0 0
    %155 = vperm.xlu0 %154, %v41
    %v156 = vpop.permute.xlu0 %155
    %159 = vset.pattern.permute.xlu0 0
    %160 = vperm.xlu0 %159, %v42
    %v161 = vpop.permute.xlu0 %160
    %v163 = vmul.f32 %v156, %v147
    %v164 = vmul.f32 %v161, %v148
    %167 = vrot.lane.b32.xlu0 %v163, 32
    %v168 = vpop.permute.xlu0 %167
    %169 = vrot.lane.b32.xlu0 %v164, 32
    %v170 = vpop.permute.xlu0 %169
    %v173 = vadd.f32 %v139, %v168
    %v174 = vadd.f32 %v145, %v170
    %175 = vset.pattern.permute.xlu0 1
    %176 = vperm.xlu0 %175, %v41
    %v177 = vpop.permute.xlu0 %176
    %179 = vset.pattern.permute.xlu0 1
    %180 = vperm.xlu0 %179, %v42
    %v181 = vpop.permute.xlu0 %180
    %v183 = vmul.f32 %v177, %v147
    %v184 = vmul.f32 %v181, %v148
    %v185 = vadd.f32 %v173, %v183
    %v186 = vadd.f32 %v174, %v184
    %187 = vset.pattern.permute.xlu0 2
    %188 = vperm.xlu0 %187, %v41
    %v189 = vpop.permute.xlu0 %188
    %191 = vset.pattern.permute.xlu0 2
    %192 = vperm.xlu0 %191, %v42
    %v193 = vpop.permute.xlu0 %192
    %v195 = vmul.f32 %v189, %v147
    %v196 = vmul.f32 %v193, %v148
    %199 = vrot.lane.b32.xlu0 %v195, 96
    %v200 = vpop.permute.xlu0 %199
    %201 = vrot.lane.b32.xlu0 %v196, 96
    %v202 = vpop.permute.xlu0 %201
    %v205 = vadd.f32 %v185, %v200
    %v206 = vadd.f32 %v186, %v202
    %207 = vset.pattern.permute.xlu0 3
    %208 = vperm.xlu0 %207, %v41
    %v209 = vpop.permute.xlu0 %208
    %211 = vset.pattern.permute.xlu0 3
    %212 = vperm.xlu0 %211, %v42
    %v213 = vpop.permute.xlu0 %212
    %v215 = vmul.f32 %v209, %v147
    %v216 = vmul.f32 %v213, %v148
    %219 = vrot.lane.b32.xlu0 %v215, 64
    %v220 = vpop.permute.xlu0 %219
    %221 = vrot.lane.b32.xlu0 %v216, 64
    %v222 = vpop.permute.xlu0 %221
    %v225 = vadd.f32 %v205, %v220
    %v226 = vadd.f32 %v206, %v222
    %vm227 = vcmp.gt.f32.partialorder %v225, 0.0
    %vm228 = vcmp.gt.f32.partialorder %v226, 0.0
    %v229 = vmin.f32 %v225, 0.0
    %v230 = vmin.f32 %v226, 0.0
    %v231 = vmul.f32 %v229, 1.442695
    %v232 = vpow.pop %v231
    %v233 = vmul.f32 %v230, 1.442695
    %v234 = vpow.pop %v233
    %v235 = vsub.f32 %v232, 1.0
    %v236 = vsub.f32 %v234, 1.0
    %v237 = vsel %vm227, %v225, %v235
    %v238 = vsel %vm228, %v226, %v236
    %241 = vrot.lane.b32.xlu0 %v149, 32
    %v242 = vpop.permute.xlu0 %241
    %243 = vrot.lane.b32.xlu0 %v150, 32
    %v244 = vpop.permute.xlu0 %243
    %v247 = vmul.f32 %v237, %v242
    %v248 = vmul.f32 %v238, %v244
    %v249 = vld [vmem:[%s4] sm:$0x1]
    %v251 = vlaneseq
    %v252 = vshrl.u32 %v251, 7
    %v253 = vsub.s32 0, %v252
    %v254 = vrot.slane %v249, %v253
    %255 = vrot.lane.b32.xlu0 %v254, 64
    %v256 = vpop.permute.xlu0 %255
    %v258 = vmul.f32 %v151, %v256
    %v259 = vmul.f32 %v152, %v256
    %262 = vrot.lane.b32.xlu0 %v258, 96
    %v263 = vpop.permute.xlu0 %262
    %264 = vrot.lane.b32.xlu0 %v259, 96
    %v265 = vpop.permute.xlu0 %264
    %v268 = vadd.f32 %v247, %v263
    %v269 = vadd.f32 %v248, %v265
    %272 = vrot.lane.b32.xlu0 %v268, 96
    %v273 = vpop.permute.xlu0 %272
    %274 = vrot.lane.b32.xlu0 %v269, 96
    %v275 = vpop.permute.xlu0 %274
    %v278 = vsel %vm63, %v273, 0.0
    %279 = vadd.xlane.f32.xlu0 %v278
    %v280 = vpop.xlane.xlu0 %279
    %v281 = vsel %vm63, %v275, 0.0
    %282 = vadd.xlane.f32.xlu0 %v281
    %v283 = vpop.xlane.xlu0 %282
    %v284 = vld [vmem:[#allocation2] sm:$0x1]
    %v286 = vlaneseq
    %v287 = vshrl.u32 %v286, 7
    %v288 = vsub.s32 0, %v287
    %v289 = vrot.slane %v284, %v288
    %v291 = vadd.f32 %v280, %v289
    %v292 = vadd.f32 %v283, %v289
    %vm293 = vcmask 7168
    %294 = vst.msk [vmem:[%s6] sm:$0xff] %vm293, %v291
    %295 = vst.msk [vmem:[%s6 + $0x8] sm:$0xff] %vm293, %v292
    // Predicated region
    $region30: #{qmixer_forward.1} parent=1 // pred_check
      _
    $region31: #{qmixer_forward.1} parent=1 // pred_check_branch
      %297 = sbr.rel (0) target = $region33
    $region32: #{qmixer_forward.1} parent=1 // pred_region
      _
    $region33: #{qmixer_forward.1} parent=1 // pred_fallthru
      _
    // Predicated region
    $region34: #{qmixer_forward.1} parent=1 // pred_check
      _
    $region35: #{qmixer_forward.1} parent=1 // pred_check_branch
      %299 = sbr.rel (0) target = $region37
    $region36: #{qmixer_forward.1} parent=1 // pred_region
      _
    $region37: #{qmixer_forward.1} parent=1 // pred_fallthru
      _
    %300 = vsyncpa [#allocation4], 1

</llo_original>
